<compile_context>
chip_gen: v5e
topology: v5e:2x2
jax: 0.10.0
libtpu: 0.0.40
codegen_flags: <defaults>
</compile_context>

<pallas_src>
import functools

import jax
import jax.numpy as jnp
from jax.experimental import pallas as pl
from jax.experimental.pallas import tpu as pltpu


def _gather_rows_kernel(ids_ref, embed_hbm, out_ref, scratch, sems, *, rows):
    """One grid step gathers `rows` embedding rows for one batch element.

    ids_ref   : (B, T_pad) int32, scalar-prefetched into SMEM
    embed_hbm : (V, D) embedding table, left in HBM (memory_space=pl.ANY)
    out_ref   : (rows, D) VMEM output block (batch dim squeezed away)
    scratch   : (rows, D) VMEM gather slab
    sems      : (rows,) DMA semaphores -> `rows` row-DMAs in flight at once
    """
    b = pl.program_id(0)
    t = pl.program_id(1)
    base = t * rows

    # Issue all row gathers first (scattered HBM reads -> keep them all
    # outstanding to hide DMA latency), then wait.
    copies = []
    for r in range(rows):                      # static Python loop, unrolled
        tok = ids_ref[b, base + r]
        cp = pltpu.make_async_copy(embed_hbm.at[tok], scratch.at[r], sems.at[r])
        cp.start()
        copies.append(cp)
    for cp in copies:
        cp.wait()

    # Single full-width, sublane/lane-dense store of the gathered slab.
    out_ref[...] = scratch[...].astype(out_ref.dtype)


def _token_embedding_gather(input_ids, embed_table, out_dtype, rows=None):
    """(B, T) int ids -> (B, T, D) gathered embeddings, Pallas batched gather."""
    B, T = input_ids.shape
    V, D = embed_table.shape
    itemsize = jnp.dtype(embed_table.dtype).itemsize

    if rows is None:
        # Full-sublane stores: 8 rows/f32, 16 rows/bf16, 32 rows/int8; grow the
        # tile (up to 32 rows) to amortize the ~0.35 us per-grid-step overhead.
        rows = {1: 32, 2: 16}.get(itemsize, 8)
        while rows * 2 <= T and rows < 32:
            rows *= 2

    T_pad = ((T + rows - 1) // rows) * rows
    ids32 = input_ids.astype(jnp.int32)
    if T_pad != T:
        ids32 = jnp.pad(ids32, ((0, 0), (0, T_pad - T)))   # pad with token 0

    kernel = functools.partial(_gather_rows_kernel, rows=rows)

    bytes_accessed = int(
        B * T_pad * D * itemsize                               # embed rows read
        + B * T_pad * D * jnp.dtype(out_dtype).itemsize        # output write
        + B * T_pad * 4)                                       # ids read

    tok_emb = pl.pallas_call(
        kernel,
        out_shape=jax.ShapeDtypeStruct((B, T_pad, D), out_dtype),
        grid_spec=pltpu.PrefetchScalarGridSpec(
            num_scalar_prefetch=1,
            grid=(B, T_pad // rows),
            in_specs=[pl.BlockSpec(memory_space=pl.ANY)],      # table stays in HBM
            out_specs=pl.BlockSpec((None, rows, D), lambda b, t, ids: (b, t, 0)),
            scratch_shapes=[
                pltpu.VMEM((rows, D), embed_table.dtype),
                pltpu.SemaphoreType.DMA((rows,)),
            ],
        ),
        compiler_params=pltpu.CompilerParams(
            dimension_semantics=("parallel", "parallel")),
        cost_estimate=pl.CostEstimate(
            flops=0, transcendentals=0, bytes_accessed=bytes_accessed),
    )(ids32, embed_table)

    return tok_emb[:, :T, :] if T_pad != T else tok_emb


def prefix_only_forward(input_ids, prefix_emb, embed_table,
                        attention_mask=None, labels=None):
    """JAX/Pallas equivalent of ModelPrefixOnly.forward up to the backbone call.

    Returns (inputs_embeds, attention_mask, labels, position_ids) exactly as the
    PyTorch module would hand them to `self.backbone(...)`.
    """
    single_sample = input_ids.ndim == 1
    if single_sample:
        input_ids = input_ids[None, :]
    B, T = input_ids.shape
    P, D = prefix_emb.shape
    S = P + T
    dtype = prefix_emb.dtype

    # Token-embedding gather: Pallas batched manual-DMA gather (HBM-bound).
    tok_emb = _token_embedding_gather(input_ids, embed_table, dtype)

    # Prefix broadcast + concat: tiny (B, P, D) fill -> plain JAX.
    # (self.dropout is Identity for dropout_prob == 0.0, the default.)
    prefix = jnp.broadcast_to(prefix_emb[None].astype(dtype), (B, P, D))
    inputs_embeds = jnp.concatenate([prefix, tok_emb], axis=1)

    # ---- glue (mask / labels / position_ids), identical to the torch code ----
    if attention_mask is None:
        attention_mask = jnp.ones((B, T), dtype=jnp.int32)
    elif attention_mask.ndim == 1:
        attention_mask = attention_mask[None, :]
    attention_mask = jnp.concatenate(
        [jnp.ones((B, P), dtype=attention_mask.dtype), attention_mask], axis=1)

    if labels is not None:
        if labels.ndim == 1:
            labels = labels[None, :]
        labels = jnp.concatenate(
            [jnp.full((B, P), -100, dtype=labels.dtype), labels], axis=1)

    # pos = [0..P-1, P..P+T-1] == arange(P+T), broadcast over batch.
    position_ids = jnp.broadcast_to(
        jnp.arange(S, dtype=jnp.int32)[None, :], (B, S))

    # TODO(synk): frozen GPT-NeoX backbone forward (transformer stack, LM head,
    #             CE loss) is an external pretrained model and is not translated.
    return inputs_embeds, attention_mask, labels, position_ids


if __name__ == "__main__":
    key = jax.random.PRNGKey(0)
    k_pref, k_emb, k_ids = jax.random.split(key, 3)

    # Small, module-consistent shapes (T not a multiple of 8 to exercise padding).
    B, T = 2, 12              # batch, token sequence length
    P = 4                     # prefix_length
    D = 256                   # hidden_size (embed_dim)
    V = 64                    # vocab size of embed_in

    # Deterministic parameter init (matches nn.init.normal_(std=0.02) semantics).
    prefix_emb = 0.02 * jax.random.normal(k_pref, (P, D), dtype=jnp.float32)
    embed_table = 0.02 * jax.random.normal(k_emb, (V, D), dtype=jnp.float32)
    input_ids = jax.random.randint(k_ids, (B, T), 0, V, dtype=jnp.int32)
    labels = input_ids  # standard causal-LM setup

    inputs_embeds, attn_mask, out_labels, pos_ids = prefix_only_forward(
        input_ids, prefix_emb, embed_table, attention_mask=None, labels=labels)
    jax.block_until_ready(inputs_embeds)

    # Pure-JAX reference for correctness of the Pallas hot path.
    ref_tok = jnp.take(embed_table, input_ids, axis=0)               # (B, T, D)
    ref_pref = jnp.broadcast_to(prefix_emb[None], (B, P, D))         # (B, P, D)
    ref_embeds = jnp.concatenate([ref_pref, ref_tok], axis=1)        # (B, P+T, D)

    assert inputs_embeds.shape == (B, P + T, D)
    assert jnp.allclose(inputs_embeds, ref_embeds, atol=1e-6, rtol=1e-6)
    assert attn_mask.shape == (B, P + T) and int(attn_mask.sum()) == B * (P + T)
    assert out_labels.shape == (B, P + T)
    assert bool(jnp.all(out_labels[:, :P] == -100))
    assert bool(jnp.all(out_labels[:, P:] == input_ids))
    assert bool(jnp.all(pos_ids[0] == jnp.arange(P + T)))

    print("KERNEL_OK")
</pallas_src>

<mosaic_0001>
module attributes {stable_mosaic.version = 11 : i64} {
  func.func @_gather_rows_kernel(%arg0: i32, %arg1: i32, %arg2: memref<2x16xi32, #tpu.memory_space<smem>>, %arg3: memref<64x256xf32, #tpu.memory_space<any>>, %arg4: memref<1x8x256xf32, #tpu.memory_space<vmem>>, %arg5: memref<8x256xf32, #tpu.memory_space<vmem>>, %arg6: memref<8x!tpu.dma_semaphore, #tpu.memory_space<semaphore_mem>>) attributes {dimension_semantics = [#tpu.dimension_semantics<parallel>, #tpu.dimension_semantics<parallel>], iteration_bounds = array<i64: 2, 2>, scalar_prefetch = 1 : i64, scratch_operands = 2 : i64, tpu.core_type = #tpu.core_type<tc>, window_params = [{}, {transform_indices = @transform_1, window_bounds = array<i64: 1, 8, 256>}]} {
    %c8_i32 = arith.constant 8 : i32
    %0 = arith.muli %arg1, %c8_i32 : i32
    %c0_i32 = arith.constant 0 : i32
    %1 = arith.addi %0, %c0_i32 : i32
    %2 = arith.index_cast %arg0 : i32 to index
    %3 = arith.index_cast %1 : i32 to index
    %4 = memref.load %arg2[%2, %3] : memref<2x16xi32, #tpu.memory_space<smem>>
    %c0_i32_0 = arith.constant 0 : i32
    %c0_i32_1 = arith.constant 0 : i32
    %c0_i32_2 = arith.constant 0 : i32
    %5 = tpu.memref_slice %arg3[%4, %c0_i32_2] : memref<64x256xf32, #tpu.memory_space<any>> -> memref<1x256xf32, #tpu.memory_space<any>>
    %6 = tpu.memref_squeeze %5 : memref<1x256xf32, #tpu.memory_space<any>> -> memref<256xf32, #tpu.memory_space<any>>
    %c0_i32_3 = arith.constant 0 : i32
    %7 = tpu.memref_slice %arg5[%c0_i32_0, %c0_i32_3] : memref<8x256xf32, #tpu.memory_space<vmem>> -> memref<1x256xf32, #tpu.memory_space<vmem>>
    %8 = tpu.memref_squeeze %7 : memref<1x256xf32, #tpu.memory_space<vmem>> -> memref<256xf32, #tpu.memory_space<vmem>>
    %9 = tpu.memref_slice %arg6[%c0_i32_1] : memref<8x!tpu.dma_semaphore, #tpu.memory_space<semaphore_mem>> -> memref<1x!tpu.dma_semaphore, #tpu.memory_space<semaphore_mem>>
    %10 = tpu.memref_squeeze %9 : memref<1x!tpu.dma_semaphore, #tpu.memory_space<semaphore_mem>> -> memref<!tpu.dma_semaphore, #tpu.memory_space<semaphore_mem>>
    tpu.enqueue_dma source(%6 : memref<256xf32, #tpu.memory_space<any>>) target(%8 : memref<256xf32, #tpu.memory_space<vmem>>) target_semaphore(%10 : memref<!tpu.dma_semaphore, #tpu.memory_space<semaphore_mem>>)
    %c1_i32 = arith.constant 1 : i32
    %11 = arith.addi %0, %c1_i32 : i32
    %12 = arith.index_cast %arg0 : i32 to index
    %13 = arith.index_cast %11 : i32 to index
    %14 = memref.load %arg2[%12, %13] : memref<2x16xi32, #tpu.memory_space<smem>>
    %c1_i32_4 = arith.constant 1 : i32
    %c1_i32_5 = arith.constant 1 : i32
    %c0_i32_6 = arith.constant 0 : i32
    %15 = tpu.memref_slice %arg3[%14, %c0_i32_6] : memref<64x256xf32, #tpu.memory_space<any>> -> memref<1x256xf32, #tpu.memory_space<any>>
    %16 = tpu.memref_squeeze %15 : memref<1x256xf32, #tpu.memory_space<any>> -> memref<256xf32, #tpu.memory_space<any>>
    %c0_i32_7 = arith.constant 0 : i32
    %17 = tpu.memref_slice %arg5[%c1_i32_4, %c0_i32_7] : memref<8x256xf32, #tpu.memory_space<vmem>> -> memref<1x256xf32, #tpu.memory_space<vmem>>
    %18 = tpu.memref_squeeze %17 : memref<1x256xf32, #tpu.memory_space<vmem>> -> memref<256xf32, #tpu.memory_space<vmem>>
    %19 = tpu.memref_slice %arg6[%c1_i32_5] : memref<8x!tpu.dma_semaphore, #tpu.memory_space<semaphore_mem>> -> memref<1x!tpu.dma_semaphore, #tpu.memory_space<semaphore_mem>>
    %20 = tpu.memref_squeeze %19 : memref<1x!tpu.dma_semaphore, #tpu.memory_space<semaphore_mem>> -> memref<!tpu.dma_semaphore, #tpu.memory_space<semaphore_mem>>
    tpu.enqueue_dma source(%16 : memref<256xf32, #tpu.memory_space<any>>) target(%18 : memref<256xf32, #tpu.memory_space<vmem>>) target_semaphore(%20 : memref<!tpu.dma_semaphore, #tpu.memory_space<semaphore_mem>>)
    %c2_i32 = arith.constant 2 : i32
    %21 = arith.addi %0, %c2_i32 : i32
    %22 = arith.index_cast %arg0 : i32 to index
    %23 = arith.index_cast %21 : i32 to index
    %24 = memref.load %arg2[%22, %23] : memref<2x16xi32, #tpu.memory_space<smem>>
    %c2_i32_8 = arith.constant 2 : i32
    %c2_i32_9 = arith.constant 2 : i32
    %c0_i32_10 = arith.constant 0 : i32
    %25 = tpu.memref_slice %arg3[%24, %c0_i32_10] : memref<64x256xf32, #tpu.memory_space<any>> -> memref<1x256xf32, #tpu.memory_space<any>>
    %26 = tpu.memref_squeeze %25 : memref<1x256xf32, #tpu.memory_space<any>> -> memref<256xf32, #tpu.memory_space<any>>
    %c0_i32_11 = arith.constant 0 : i32
    %27 = tpu.memref_slice %arg5[%c2_i32_8, %c0_i32_11] : memref<8x256xf32, #tpu.memory_space<vmem>> -> memref<1x256xf32, #tpu.memory_space<vmem>>
    %28 = tpu.memref_squeeze %27 : memref<1x256xf32, #tpu.memory_space<vmem>> -> memref<256xf32, #tpu.memory_space<vmem>>
    %29 = tpu.memref_slice %arg6[%c2_i32_9] : memref<8x!tpu.dma_semaphore, #tpu.memory_space<semaphore_mem>> -> memref<1x!tpu.dma_semaphore, #tpu.memory_space<semaphore_mem>>
    %30 = tpu.memref_squeeze %29 : memref<1x!tpu.dma_semaphore, #tpu.memory_space<semaphore_mem>> -> memref<!tpu.dma_semaphore, #tpu.memory_space<semaphore_mem>>
    tpu.enqueue_dma source(%26 : memref<256xf32, #tpu.memory_space<any>>) target(%28 : memref<256xf32, #tpu.memory_space<vmem>>) target_semaphore(%30 : memref<!tpu.dma_semaphore, #tpu.memory_space<semaphore_mem>>)
    %c3_i32 = arith.constant 3 : i32
    %31 = arith.addi %0, %c3_i32 : i32
    %32 = arith.index_cast %arg0 : i32 to index
    %33 = arith.index_cast %31 : i32 to index
    %34 = memref.load %arg2[%32, %33] : memref<2x16xi32, #tpu.memory_space<smem>>
    %c3_i32_12 = arith.constant 3 : i32
    %c3_i32_13 = arith.constant 3 : i32
    %c0_i32_14 = arith.constant 0 : i32
    %35 = tpu.memref_slice %arg3[%34, %c0_i32_14] : memref<64x256xf32, #tpu.memory_space<any>> -> memref<1x256xf32, #tpu.memory_space<any>>
    %36 = tpu.memref_squeeze %35 : memref<1x256xf32, #tpu.memory_space<any>> -> memref<256xf32, #tpu.memory_space<any>>
    %c0_i32_15 = arith.constant 0 : i32
    %37 = tpu.memref_slice %arg5[%c3_i32_12, %c0_i32_15] : memref<8x256xf32, #tpu.memory_space<vmem>> -> memref<1x256xf32, #tpu.memory_space<vmem>>
    %38 = tpu.memref_squeeze %37 : memref<1x256xf32, #tpu.memory_space<vmem>> -> memref<256xf32, #tpu.memory_space<vmem>>
    %39 = tpu.memref_slice %arg6[%c3_i32_13] : memref<8x!tpu.dma_semaphore, #tpu.memory_space<semaphore_mem>> -> memref<1x!tpu.dma_semaphore, #tpu.memory_space<semaphore_mem>>
    %40 = tpu.memref_squeeze %39 : memref<1x!tpu.dma_semaphore, #tpu.memory_space<semaphore_mem>> -> memref<!tpu.dma_semaphore, #tpu.memory_space<semaphore_mem>>
    tpu.enqueue_dma source(%36 : memref<256xf32, #tpu.memory_space<any>>) target(%38 : memref<256xf32, #tpu.memory_space<vmem>>) target_semaphore(%40 : memref<!tpu.dma_semaphore, #tpu.memory_space<semaphore_mem>>)
    %c4_i32 = arith.constant 4 : i32
    %41 = arith.addi %0, %c4_i32 : i32
    %42 = arith.index_cast %arg0 : i32 to index
    %43 = arith.index_cast %41 : i32 to index
    %44 = memref.load %arg2[%42, %43] : memref<2x16xi32, #tpu.memory_space<smem>>
    %c4_i32_16 = arith.constant 4 : i32
    %c4_i32_17 = arith.constant 4 : i32
    %c0_i32_18 = arith.constant 0 : i32
    %45 = tpu.memref_slice %arg3[%44, %c0_i32_18] : memref<64x256xf32, #tpu.memory_space<any>> -> memref<1x256xf32, #tpu.memory_space<any>>
    %46 = tpu.memref_squeeze %45 : memref<1x256xf32, #tpu.memory_space<any>> -> memref<256xf32, #tpu.memory_space<any>>
    %c0_i32_19 = arith.constant 0 : i32
    %47 = tpu.memref_slice %arg5[%c4_i32_16, %c0_i32_19] : memref<8x256xf32, #tpu.memory_space<vmem>> -> memref<1x256xf32, #tpu.memory_space<vmem>>
    %48 = tpu.memref_squeeze %47 : memref<1x256xf32, #tpu.memory_space<vmem>> -> memref<256xf32, #tpu.memory_space<vmem>>
    %49 = tpu.memref_slice %arg6[%c4_i32_17] : memref<8x!tpu.dma_semaphore, #tpu.memory_space<semaphore_mem>> -> memref<1x!tpu.dma_semaphore, #tpu.memory_space<semaphore_mem>>
    %50 = tpu.memref_squeeze %49 : memref<1x!tpu.dma_semaphore, #tpu.memory_space<semaphore_mem>> -> memref<!tpu.dma_semaphore, #tpu.memory_space<semaphore_mem>>
    tpu.enqueue_dma source(%46 : memref<256xf32, #tpu.memory_space<any>>) target(%48 : memref<256xf32, #tpu.memory_space<vmem>>) target_semaphore(%50 : memref<!tpu.dma_semaphore, #tpu.memory_space<semaphore_mem>>)
    %c5_i32 = arith.constant 5 : i32
    %51 = arith.addi %0, %c5_i32 : i32
    %52 = arith.index_cast %arg0 : i32 to index
    %53 = arith.index_cast %51 : i32 to index
    %54 = memref.load %arg2[%52, %53] : memref<2x16xi32, #tpu.memory_space<smem>>
    %c5_i32_20 = arith.constant 5 : i32
    %c5_i32_21 = arith.constant 5 : i32
    %c0_i32_22 = arith.constant 0 : i32
    %55 = tpu.memref_slice %arg3[%54, %c0_i32_22] : memref<64x256xf32, #tpu.memory_space<any>> -> memref<1x256xf32, #tpu.memory_space<any>>
    %56 = tpu.memref_squeeze %55 : memref<1x256xf32, #tpu.memory_space<any>> -> memref<256xf32, #tpu.memory_space<any>>
    %c0_i32_23 = arith.constant 0 : i32
    %57 = tpu.memref_slice %arg5[%c5_i32_20, %c0_i32_23] : memref<8x256xf32, #tpu.memory_space<vmem>> -> memref<1x256xf32, #tpu.memory_space<vmem>>
    %58 = tpu.memref_squeeze %57 : memref<1x256xf32, #tpu.memory_space<vmem>> -> memref<256xf32, #tpu.memory_space<vmem>>
    %59 = tpu.memref_slice %arg6[%c5_i32_21] : memref<8x!tpu.dma_semaphore, #tpu.memory_space<semaphore_mem>> -> memref<1x!tpu.dma_semaphore, #tpu.memory_space<semaphore_mem>>
    %60 = tpu.memref_squeeze %59 : memref<1x!tpu.dma_semaphore, #tpu.memory_space<semaphore_mem>> -> memref<!tpu.dma_semaphore, #tpu.memory_space<semaphore_mem>>
    tpu.enqueue_dma source(%56 : memref<256xf32, #tpu.memory_space<any>>) target(%58 : memref<256xf32, #tpu.memory_space<vmem>>) target_semaphore(%60 : memref<!tpu.dma_semaphore, #tpu.memory_space<semaphore_mem>>)
    %c6_i32 = arith.constant 6 : i32
    %61 = arith.addi %0, %c6_i32 : i32
    %62 = arith.index_cast %arg0 : i32 to index
    %63 = arith.index_cast %61 : i32 to index
    %64 = memref.load %arg2[%62, %63] : memref<2x16xi32, #tpu.memory_space<smem>>
    %c6_i32_24 = arith.constant 6 : i32
    %c6_i32_25 = arith.constant 6 : i32
    %c0_i32_26 = arith.constant 0 : i32
    %65 = tpu.memref_slice %arg3[%64, %c0_i32_26] : memref<64x256xf32, #tpu.memory_space<any>> -> memref<1x256xf32, #tpu.memory_space<any>>
    %66 = tpu.memref_squeeze %65 : memref<1x256xf32, #tpu.memory_space<any>> -> memref<256xf32, #tpu.memory_space<any>>
    %c0_i32_27 = arith.constant 0 : i32
    %67 = tpu.memref_slice %arg5[%c6_i32_24, %c0_i32_27] : memref<8x256xf32, #tpu.memory_space<vmem>> -> memref<1x256xf32, #tpu.memory_space<vmem>>
    %68 = tpu.memref_squeeze %67 : memref<1x256xf32, #tpu.memory_space<vmem>> -> memref<256xf32, #tpu.memory_space<vmem>>
    %69 = tpu.memref_slice %arg6[%c6_i32_25] : memref<8x!tpu.dma_semaphore, #tpu.memory_space<semaphore_mem>> -> memref<1x!tpu.dma_semaphore, #tpu.memory_space<semaphore_mem>>
    %70 = tpu.memref_squeeze %69 : memref<1x!tpu.dma_semaphore, #tpu.memory_space<semaphore_mem>> -> memref<!tpu.dma_semaphore, #tpu.memory_space<semaphore_mem>>
    tpu.enqueue_dma source(%66 : memref<256xf32, #tpu.memory_space<any>>) target(%68 : memref<256xf32, #tpu.memory_space<vmem>>) target_semaphore(%70 : memref<!tpu.dma_semaphore, #tpu.memory_space<semaphore_mem>>)
    %c7_i32 = arith.constant 7 : i32
    %71 = arith.addi %0, %c7_i32 : i32
    %72 = arith.index_cast %arg0 : i32 to index
    %73 = arith.index_cast %71 : i32 to index
    %74 = memref.load %arg2[%72, %73] : memref<2x16xi32, #tpu.memory_space<smem>>
    %c7_i32_28 = arith.constant 7 : i32
    %c7_i32_29 = arith.constant 7 : i32
    %c0_i32_30 = arith.constant 0 : i32
    %75 = tpu.memref_slice %arg3[%74, %c0_i32_30] : memref<64x256xf32, #tpu.memory_space<any>> -> memref<1x256xf32, #tpu.memory_space<any>>
    %76 = tpu.memref_squeeze %75 : memref<1x256xf32, #tpu.memory_space<any>> -> memref<256xf32, #tpu.memory_space<any>>
    %c0_i32_31 = arith.constant 0 : i32
    %77 = tpu.memref_slice %arg5[%c7_i32_28, %c0_i32_31] : memref<8x256xf32, #tpu.memory_space<vmem>> -> memref<1x256xf32, #tpu.memory_space<vmem>>
    %78 = tpu.memref_squeeze %77 : memref<1x256xf32, #tpu.memory_space<vmem>> -> memref<256xf32, #tpu.memory_space<vmem>>
    %79 = tpu.memref_slice %arg6[%c7_i32_29] : memref<8x!tpu.dma_semaphore, #tpu.memory_space<semaphore_mem>> -> memref<1x!tpu.dma_semaphore, #tpu.memory_space<semaphore_mem>>
    %80 = tpu.memref_squeeze %79 : memref<1x!tpu.dma_semaphore, #tpu.memory_space<semaphore_mem>> -> memref<!tpu.dma_semaphore, #tpu.memory_space<semaphore_mem>>
    tpu.enqueue_dma source(%76 : memref<256xf32, #tpu.memory_space<any>>) target(%78 : memref<256xf32, #tpu.memory_space<vmem>>) target_semaphore(%80 : memref<!tpu.dma_semaphore, #tpu.memory_space<semaphore_mem>>)
    %c0_i32_32 = arith.constant 0 : i32
    %c0_i32_33 = arith.constant 0 : i32
    %c0_i32_34 = arith.constant 0 : i32
    %81 = tpu.memref_slice %arg3[%4, %c0_i32_34] : memref<64x256xf32, #tpu.memory_space<any>> -> memref<1x256xf32, #tpu.memory_space<any>>
    %82 = tpu.memref_squeeze %81 : memref<1x256xf32, #tpu.memory_space<any>> -> memref<256xf32, #tpu.memory_space<any>>
    %c0_i32_35 = arith.constant 0 : i32
    %83 = tpu.memref_slice %arg5[%c0_i32_32, %c0_i32_35] : memref<8x256xf32, #tpu.memory_space<vmem>> -> memref<1x256xf32, #tpu.memory_space<vmem>>
    %84 = tpu.memref_squeeze %83 : memref<1x256xf32, #tpu.memory_space<vmem>> -> memref<256xf32, #tpu.memory_space<vmem>>
    %85 = tpu.memref_slice %arg6[%c0_i32_33] : memref<8x!tpu.dma_semaphore, #tpu.memory_space<semaphore_mem>> -> memref<1x!tpu.dma_semaphore, #tpu.memory_space<semaphore_mem>>
    %86 = tpu.memref_squeeze %85 : memref<1x!tpu.dma_semaphore, #tpu.memory_space<semaphore_mem>> -> memref<!tpu.dma_semaphore, #tpu.memory_space<semaphore_mem>>
    tpu.wait_dma2 semaphore(%86 : memref<!tpu.dma_semaphore, #tpu.memory_space<semaphore_mem>>) src(%82 : memref<256xf32, #tpu.memory_space<any>>) dst(%84 : memref<256xf32, #tpu.memory_space<vmem>>)
    %c1_i32_36 = arith.constant 1 : i32
    %c1_i32_37 = arith.constant 1 : i32
    %c0_i32_38 = arith.constant 0 : i32
    %87 = tpu.memref_slice %arg3[%14, %c0_i32_38] : memref<64x256xf32, #tpu.memory_space<any>> -> memref<1x256xf32, #tpu.memory_space<any>>
    %88 = tpu.memref_squeeze %87 : memref<1x256xf32, #tpu.memory_space<any>> -> memref<256xf32, #tpu.memory_space<any>>
    %c0_i32_39 = arith.constant 0 : i32
    %89 = tpu.memref_slice %arg5[%c1_i32_36, %c0_i32_39] : memref<8x256xf32, #tpu.memory_space<vmem>> -> memref<1x256xf32, #tpu.memory_space<vmem>>
    %90 = tpu.memref_squeeze %89 : memref<1x256xf32, #tpu.memory_space<vmem>> -> memref<256xf32, #tpu.memory_space<vmem>>
    %91 = tpu.memref_slice %arg6[%c1_i32_37] : memref<8x!tpu.dma_semaphore, #tpu.memory_space<semaphore_mem>> -> memref<1x!tpu.dma_semaphore, #tpu.memory_space<semaphore_mem>>
    %92 = tpu.memref_squeeze %91 : memref<1x!tpu.dma_semaphore, #tpu.memory_space<semaphore_mem>> -> memref<!tpu.dma_semaphore, #tpu.memory_space<semaphore_mem>>
    tpu.wait_dma2 semaphore(%92 : memref<!tpu.dma_semaphore, #tpu.memory_space<semaphore_mem>>) src(%88 : memref<256xf32, #tpu.memory_space<any>>) dst(%90 : memref<256xf32, #tpu.memory_space<vmem>>)
    %c2_i32_40 = arith.constant 2 : i32
    %c2_i32_41 = arith.constant 2 : i32
    %c0_i32_42 = arith.constant 0 : i32
    %93 = tpu.memref_slice %arg3[%24, %c0_i32_42] : memref<64x256xf32, #tpu.memory_space<any>> -> memref<1x256xf32, #tpu.memory_space<any>>
    %94 = tpu.memref_squeeze %93 : memref<1x256xf32, #tpu.memory_space<any>> -> memref<256xf32, #tpu.memory_space<any>>
    %c0_i32_43 = arith.constant 0 : i32
    %95 = tpu.memref_slice %arg5[%c2_i32_40, %c0_i32_43] : memref<8x256xf32, #tpu.memory_space<vmem>> -> memref<1x256xf32, #tpu.memory_space<vmem>>
    %96 = tpu.memref_squeeze %95 : memref<1x256xf32, #tpu.memory_space<vmem>> -> memref<256xf32, #tpu.memory_space<vmem>>
    %97 = tpu.memref_slice %arg6[%c2_i32_41] : memref<8x!tpu.dma_semaphore, #tpu.memory_space<semaphore_mem>> -> memref<1x!tpu.dma_semaphore, #tpu.memory_space<semaphore_mem>>
    %98 = tpu.memref_squeeze %97 : memref<1x!tpu.dma_semaphore, #tpu.memory_space<semaphore_mem>> -> memref<!tpu.dma_semaphore, #tpu.memory_space<semaphore_mem>>
    tpu.wait_dma2 semaphore(%98 : memref<!tpu.dma_semaphore, #tpu.memory_space<semaphore_mem>>) src(%94 : memref<256xf32, #tpu.memory_space<any>>) dst(%96 : memref<256xf32, #tpu.memory_space<vmem>>)
    %c3_i32_44 = arith.constant 3 : i32
    %c3_i32_45 = arith.constant 3 : i32
    %c0_i32_46 = arith.constant 0 : i32
    %99 = tpu.memref_slice %arg3[%34, %c0_i32_46] : memref<64x256xf32, #tpu.memory_space<any>> -> memref<1x256xf32, #tpu.memory_space<any>>
    %100 = tpu.memref_squeeze %99 : memref<1x256xf32, #tpu.memory_space<any>> -> memref<256xf32, #tpu.memory_space<any>>
    %c0_i32_47 = arith.constant 0 : i32
    %101 = tpu.memref_slice %arg5[%c3_i32_44, %c0_i32_47] : memref<8x256xf32, #tpu.memory_space<vmem>> -> memref<1x256xf32, #tpu.memory_space<vmem>>
    %102 = tpu.memref_squeeze %101 : memref<1x256xf32, #tpu.memory_space<vmem>> -> memref<256xf32, #tpu.memory_space<vmem>>
    %103 = tpu.memref_slice %arg6[%c3_i32_45] : memref<8x!tpu.dma_semaphore, #tpu.memory_space<semaphore_mem>> -> memref<1x!tpu.dma_semaphore, #tpu.memory_space<semaphore_mem>>
    %104 = tpu.memref_squeeze %103 : memref<1x!tpu.dma_semaphore, #tpu.memory_space<semaphore_mem>> -> memref<!tpu.dma_semaphore, #tpu.memory_space<semaphore_mem>>
    tpu.wait_dma2 semaphore(%104 : memref<!tpu.dma_semaphore, #tpu.memory_space<semaphore_mem>>) src(%100 : memref<256xf32, #tpu.memory_space<any>>) dst(%102 : memref<256xf32, #tpu.memory_space<vmem>>)
    %c4_i32_48 = arith.constant 4 : i32
    %c4_i32_49 = arith.constant 4 : i32
    %c0_i32_50 = arith.constant 0 : i32
    %105 = tpu.memref_slice %arg3[%44, %c0_i32_50] : memref<64x256xf32, #tpu.memory_space<any>> -> memref<1x256xf32, #tpu.memory_space<any>>
    %106 = tpu.memref_squeeze %105 : memref<1x256xf32, #tpu.memory_space<any>> -> memref<256xf32, #tpu.memory_space<any>>
    %c0_i32_51 = arith.constant 0 : i32
    %107 = tpu.memref_slice %arg5[%c4_i32_48, %c0_i32_51] : memref<8x256xf32, #tpu.memory_space<vmem>> -> memref<1x256xf32, #tpu.memory_space<vmem>>
    %108 = tpu.memref_squeeze %107 : memref<1x256xf32, #tpu.memory_space<vmem>> -> memref<256xf32, #tpu.memory_space<vmem>>
    %109 = tpu.memref_slice %arg6[%c4_i32_49] : memref<8x!tpu.dma_semaphore, #tpu.memory_space<semaphore_mem>> -> memref<1x!tpu.dma_semaphore, #tpu.memory_space<semaphore_mem>>
    %110 = tpu.memref_squeeze %109 : memref<1x!tpu.dma_semaphore, #tpu.memory_space<semaphore_mem>> -> memref<!tpu.dma_semaphore, #tpu.memory_space<semaphore_mem>>
    tpu.wait_dma2 semaphore(%110 : memref<!tpu.dma_semaphore, #tpu.memory_space<semaphore_mem>>) src(%106 : memref<256xf32, #tpu.memory_space<any>>) dst(%108 : memref<256xf32, #tpu.memory_space<vmem>>)
    %c5_i32_52 = arith.constant 5 : i32
    %c5_i32_53 = arith.constant 5 : i32
    %c0_i32_54 = arith.constant 0 : i32
    %111 = tpu.memref_slice %arg3[%54, %c0_i32_54] : memref<64x256xf32, #tpu.memory_space<any>> -> memref<1x256xf32, #tpu.memory_space<any>>
    %112 = tpu.memref_squeeze %111 : memref<1x256xf32, #tpu.memory_space<any>> -> memref<256xf32, #tpu.memory_space<any>>
    %c0_i32_55 = arith.constant 0 : i32
    %113 = tpu.memref_slice %arg5[%c5_i32_52, %c0_i32_55] : memref<8x256xf32, #tpu.memory_space<vmem>> -> memref<1x256xf32, #tpu.memory_space<vmem>>
    %114 = tpu.memref_squeeze %113 : memref<1x256xf32, #tpu.memory_space<vmem>> -> memref<256xf32, #tpu.memory_space<vmem>>
    %115 = tpu.memref_slice %arg6[%c5_i32_53] : memref<8x!tpu.dma_semaphore, #tpu.memory_space<semaphore_mem>> -> memref<1x!tpu.dma_semaphore, #tpu.memory_space<semaphore_mem>>
    %116 = tpu.memref_squeeze %115 : memref<1x!tpu.dma_semaphore, #tpu.memory_space<semaphore_mem>> -> memref<!tpu.dma_semaphore, #tpu.memory_space<semaphore_mem>>
    tpu.wait_dma2 semaphore(%116 : memref<!tpu.dma_semaphore, #tpu.memory_space<semaphore_mem>>) src(%112 : memref<256xf32, #tpu.memory_space<any>>) dst(%114 : memref<256xf32, #tpu.memory_space<vmem>>)
    %c6_i32_56 = arith.constant 6 : i32
    %c6_i32_57 = arith.constant 6 : i32
    %c0_i32_58 = arith.constant 0 : i32
    %117 = tpu.memref_slice %arg3[%64, %c0_i32_58] : memref<64x256xf32, #tpu.memory_space<any>> -> memref<1x256xf32, #tpu.memory_space<any>>
    %118 = tpu.memref_squeeze %117 : memref<1x256xf32, #tpu.memory_space<any>> -> memref<256xf32, #tpu.memory_space<any>>
    %c0_i32_59 = arith.constant 0 : i32
    %119 = tpu.memref_slice %arg5[%c6_i32_56, %c0_i32_59] : memref<8x256xf32, #tpu.memory_space<vmem>> -> memref<1x256xf32, #tpu.memory_space<vmem>>
    %120 = tpu.memref_squeeze %119 : memref<1x256xf32, #tpu.memory_space<vmem>> -> memref<256xf32, #tpu.memory_space<vmem>>
    %121 = tpu.memref_slice %arg6[%c6_i32_57] : memref<8x!tpu.dma_semaphore, #tpu.memory_space<semaphore_mem>> -> memref<1x!tpu.dma_semaphore, #tpu.memory_space<semaphore_mem>>
    %122 = tpu.memref_squeeze %121 : memref<1x!tpu.dma_semaphore, #tpu.memory_space<semaphore_mem>> -> memref<!tpu.dma_semaphore, #tpu.memory_space<semaphore_mem>>
    tpu.wait_dma2 semaphore(%122 : memref<!tpu.dma_semaphore, #tpu.memory_space<semaphore_mem>>) src(%118 : memref<256xf32, #tpu.memory_space<any>>) dst(%120 : memref<256xf32, #tpu.memory_space<vmem>>)
    %c7_i32_60 = arith.constant 7 : i32
    %c7_i32_61 = arith.constant 7 : i32
    %c0_i32_62 = arith.constant 0 : i32
    %123 = tpu.memref_slice %arg3[%74, %c0_i32_62] : memref<64x256xf32, #tpu.memory_space<any>> -> memref<1x256xf32, #tpu.memory_space<any>>
    %124 = tpu.memref_squeeze %123 : memref<1x256xf32, #tpu.memory_space<any>> -> memref<256xf32, #tpu.memory_space<any>>
    %c0_i32_63 = arith.constant 0 : i32
    %125 = tpu.memref_slice %arg5[%c7_i32_60, %c0_i32_63] : memref<8x256xf32, #tpu.memory_space<vmem>> -> memref<1x256xf32, #tpu.memory_space<vmem>>
    %126 = tpu.memref_squeeze %125 : memref<1x256xf32, #tpu.memory_space<vmem>> -> memref<256xf32, #tpu.memory_space<vmem>>
    %127 = tpu.memref_slice %arg6[%c7_i32_61] : memref<8x!tpu.dma_semaphore, #tpu.memory_space<semaphore_mem>> -> memref<1x!tpu.dma_semaphore, #tpu.memory_space<semaphore_mem>>
    %128 = tpu.memref_squeeze %127 : memref<1x!tpu.dma_semaphore, #tpu.memory_space<semaphore_mem>> -> memref<!tpu.dma_semaphore, #tpu.memory_space<semaphore_mem>>
    tpu.wait_dma2 semaphore(%128 : memref<!tpu.dma_semaphore, #tpu.memory_space<semaphore_mem>>) src(%124 : memref<256xf32, #tpu.memory_space<any>>) dst(%126 : memref<256xf32, #tpu.memory_space<vmem>>)
    %c0 = arith.constant 0 : index
    %c0_64 = arith.constant 0 : index
    %129 = vector.load %arg5[%c0, %c0_64] : memref<8x256xf32, #tpu.memory_space<vmem>>, vector<8x256xf32>
    %c0_65 = arith.constant 0 : index
    %c0_66 = arith.constant 0 : index
    %c0_67 = arith.constant 0 : index
    %130 = vector.load %arg4[%c0_65, %c0_66, %c0_67] : memref<1x8x256xf32, #tpu.memory_space<vmem>>, vector<1x8x256xf32>
    %131 = vector.shape_cast %130 : vector<1x8x256xf32> to vector<8x256xf32>
    %132 = vector.shape_cast %129 : vector<8x256xf32> to vector<1x8x256xf32>
    tpu.vector_store %arg4[%c0_65, %c0_66, %c0_67], %132 {strides = array<i32>} : memref<1x8x256xf32, #tpu.memory_space<vmem>>, vector<1x8x256xf32>,
    return
  }
  func.func @transform_1(%arg0: i32, %arg1: i32, %arg2: memref<2x16xi32, #tpu.memory_space<smem>>) -> (i32, i32, i32) {
    %c0_i32 = arith.constant 0 : i32
    %c0_i32_0 = arith.constant 0 : i32
    return %arg0, %arg1, %c0_i32 : i32, i32, i32
  }
}

</mosaic_0001>

<llo_original>
// kernel: tpu_custom_call.1
$region0: #{tpu_custom_call.1}
  #allocation0 [shape = 'u32[]', space=smem, size = 0x4, offset = 0x4, fixed_abs, tag = 'smem constant byte address 0x4 - core index']
  #allocation1 [shape = 'u32[72,128]{1,0:T(1,128)}', space=vmem, size = 0x9000, scoped, tag = 'internal scratch']
  #allocation2 [shape = 'f32[8,256]{1,0:T(8,128)}', space=vmem, size = 0x2000, scoped, tag = 'scratch operand']
  #allocation3 [shape = 's32[8]{0}', space=sflag, size = 0x20, scoped, tag = 'scratch operand']
  #allocation4 [shape = 's32[1]{0}', space=sflag, size = 0x4, scoped, tag = 'scoped memory for tpu_custom_call.1']
  #allocation5 [shape = 'u8[1024]{0}', space=smem, size = 0x400, scoped, tag = 'prefetched SMEM operand 0']
  #allocation8 [shape = 's32[]', space=sflag, size = 0x4, offset = 0, fixed_abs, tag = 'sflag constant byte address 0x0 - dummy sync flag']
  #allocation9 [shape = 's32[]', space=sflag, size = 0x4, offset = 0, fixed_abs, tag = 'sflag constant byte address 0x0 - dummy sync flag']
  #allocation10 [shape = 's32[]', space=sflag, size = 0x4, offset = 0, fixed_abs, tag = 'sflag constant byte address 0x0 - dummy sync flag']
  #allocation11 [shape = 's32[]', space=sflag, size = 0x4, offset = 0, fixed_abs, tag = 'sflag constant byte address 0x0 - dummy sync flag']
  #allocation12 [shape = 's32[]', space=sflag, size = 0x4, offset = 0, fixed_abs, tag = 'sflag constant byte address 0x0 - dummy sync flag']
  #allocation13 [shape = 's32[]', space=sflag, size = 0x4, offset = 0, fixed_abs, tag = 'sflag constant byte address 0x0 - dummy sync flag']
  #allocation14 [shape = 's32[]', space=sflag, size = 0x4, offset = 0, fixed_abs, tag = 'sflag constant byte address 0x0 - dummy sync flag']
  #allocation15 [shape = 's32[]', space=sflag, size = 0x4, offset = 0, fixed_abs, tag = 'sflag constant byte address 0x0 - dummy sync flag']
  %s0 = inlined_call_operand.hbm [shape: s32[2,16], index: 0, kind: input, shape index: {}]
  %s1 = inlined_call_operand.hbm [shape: f32[64,256], index: 1, kind: input, shape index: {}]
  %s2 = inlined_call_operand.hbm [shape: f32[2,16,256], index: 2, kind: output, shape index: {}]
  %s3 = sld [smem:[#allocation0]]
  $region25: #{tpu_custom_call.1} parent=0
    _
  %s5 = ssub.s32 1, %s3
  %s6 = scalar_select 0, %s5, %s3
  %s8 = sshll.u32 %s0, 4
  %s9 = int_to_ptr.hbm [resolvable:$true] %s8
  %11 = dma.hbm_to_smem %s9, 32, [#allocation5], [#allocation4]
  %13 = dma.done [#allocation4], 32
  %14 = sfence
  $region1: #{tpu_custom_call.1} parent=0
    #allocation6 [shape = 'u8[16384]{0}', space=vmem, size = 0x4000, scoped, tag = 'output window, operand 0']
    #allocation7 [shape = 's32[2]{0}', space=sflag, size = 0x8, scoped, tag = 'scoped memory for tpu_custom_call.1']
    %15 = vsyncpa [#allocation7], 0
    %s16 = scalar_lea.sflag [#allocation7], 1
    %17 = vsyncpa %s16, 0
    loop: start=0, step=1, limit=5
    $region2: #{tpu_custom_call.1} parent=1 // loop_pre_header
      _
    $region3: #{tpu_custom_call.1} parent=1 // loop_header
      %s19 = sphi 0, %s23
      %p20 = scmp.ge.s32.totalorder %s19, 5
      %s25 = sphi 0, %s35
      %s26 = sphi 0, %s31
      %s27 = sphi 0, %s25
      %s28 = sphi 0, %s26
      %s40 = sphi 0, %s42
      %s43 = sphi 0, %s40
      %s53 = sphi 0, %s43
    $region4: #{tpu_custom_call.1} parent=1 // loop_header_branch
      %22 = sbr.rel (%p20) target = $region8
    $region5: #{tpu_custom_call.1} parent=1 // loop_body
      %s24 = ssub.s32 %s19, 1
      %s29 = sadd.s32 1, %s26
      %p30 = scmp.ge.s32.totalorder %s29, 2
      %s31 = scalar_select %p30, 0, %s29
      %s32 = sadd.s32 1, %s25
      %s33 = scalar_select %p30, %s32, %s25
      %p34 = scmp.ge.s32.totalorder %s33, 2
      %s35 = scalar_select %p34, 0, %s33
      %s36 = ssub.s32 %s25, %s35
      %s37 = ssub.s32 %s26, %s31
      %s38 = sor.u32 %s36, %s37
      %p39 = scmp.eq.s32.totalorder %s38, 0
      %s41 = sadd.s32 %s40, 1
      %s42 = scalar_select %p39, %s40, %s41
      %p44 = pneg %p39
      %p45 = scmp.eq.s32.totalorder %s19, 3
      %p46 = por %p44, %p45
      %p47 = scmp.ne.s32.totalorder %s40, %s43
      %p48 = scmp.eq.s32.totalorder %s19, 0
      %p49 = por %p47, %p48
      %p50 = scmp.ne.s32.totalorder %s40, %s43
      %p51 = scmp.eq.s32.totalorder %s24, 3
      %p52 = por %p50, %p51
      %p54 = scmp.ne.s32.totalorder %s43, %s53
      %p55 = scmp.eq.s32.totalorder %s24, 0
      %p56 = por %p54, %p55
      %p57 = scmp.lt.s32.totalorder %s19, 4
      // Predicated region
      $region9: #{tpu_custom_call.1} parent=5 // pred_check
        %p58 = pneg %p57
      $region10: #{tpu_custom_call.1} parent=5 // pred_check_branch
        %60 = sbr.rel (%p58) target = $region12
      $region11: #{tpu_custom_call.1} parent=5 // pred_region
        %p61 = pneg %p49
        %p62 = pneg %p46
        %s63 = sand.u32 %s40, 1
        %s64 = scalar_lea.sflag [#allocation7], %s63
        %s65 = sand.u32 %s40, 1
        %s66 = smul.addr %s65, 16
        %s67 = scalar_lea.vmem [#allocation6], %s66
        %s68 = smul.u32 %s26, 8
        %s69 = sshra.s32 %s68, 7
        %s70 = sand.u32 %s68, 127
        %s71 = sadd.s32 %s69, %s25
        %s72 = smul.u32 %s71, 128
        %s73 = sshra.s32 %s68, 7
        %s74 = sand.u32 %s68, 127
        %s75 = sadd.s32 %s72, %s74
        %s76 = sld [smem:[#allocation5 + %s75]]
        %s77 = sshrl.u32 %s76, 3
        %s78 = sand.u32 %s76, 7
        %s79 = smul.u32 %s77, 16
        %s80 = sadd.s32 %s78, %s79
        %s81 = scalar_lea.hbm %s1, %s80
        %s82 = sshll.u32 %s81, 4
        %s83 = int_to_ptr.hbm [resolvable:$true] %s82
        %s84 = sshll.u32 [#allocation2], 4
        %s85 = int_to_ptr.vmem [resolvable:$true] %s84
        %89 = dma.hbm_to_vmem [thread:$0]  %s83, 32, %s85, [#allocation3], 128, 128, 1
        %s90 = sadd.s32 %s68, 1
        %s91 = sshra.s32 %s90, 7
        %s92 = sand.u32 %s90, 127
        %s93 = sadd.s32 %s91, %s25
        %s94 = smul.u32 %s93, 128
        %s95 = sshra.s32 %s90, 7
        %s96 = sand.u32 %s90, 127
        %s97 = sadd.s32 %s94, %s96
        %s98 = sld [smem:[#allocation5 + %s97]]
        %s99 = sshrl.u32 %s98, 3
        %s100 = sand.u32 %s98, 7
        %s101 = smul.u32 %s99, 16
        %s102 = sadd.s32 %s100, %s101
        %s103 = scalar_lea.hbm %s1, %s102
        %s104 = scalar_lea.vmem [#allocation2], 1
        %s105 = scalar_lea.sflag [#allocation3], 1
        %s106 = sshll.u32 %s103, 4
        %s107 = int_to_ptr.hbm [resolvable:$true] %s106
        %s108 = sshll.u32 %s104, 4
        %s109 = int_to_ptr.vmem [resolvable:$true] %s108
        %113 = dma.hbm_to_vmem [thread:$0]  %s107, 32, %s109, %s105, 128, 128, 1
        %s114 = sadd.s32 %s68, 2
        %s115 = sshra.s32 %s114, 7
        %s116 = sand.u32 %s114, 127
        %s117 = sadd.s32 %s115, %s25
        %s118 = smul.u32 %s117, 128
        %s119 = sshra.s32 %s114, 7
        %s120 = sand.u32 %s114, 127
        %s121 = sadd.s32 %s118, %s120
        %s122 = sld [smem:[#allocation5 + %s121]]
        %s123 = sshrl.u32 %s122, 3
        %s124 = sand.u32 %s122, 7
        %s125 = smul.u32 %s123, 16
        %s126 = sadd.s32 %s124, %s125
        %s127 = scalar_lea.hbm %s1, %s126
        %s128 = scalar_lea.vmem [#allocation2], 2
        %s129 = scalar_lea.sflag [#allocation3], 2
        %s130 = sshll.u32 %s127, 4
        %s131 = int_to_ptr.hbm [resolvable:$true] %s130
        %s132 = sshll.u32 %s128, 4
        %s133 = int_to_ptr.vmem [resolvable:$true] %s132
        %137 = dma.hbm_to_vmem [thread:$0]  %s131, 32, %s133, %s129, 128, 128, 1
        %s138 = sadd.s32 %s68, 3
        %s139 = sshra.s32 %s138, 7
        %s140 = sand.u32 %s138, 127
        %s141 = sadd.s32 %s139, %s25
        %s142 = smul.u32 %s141, 128
        %s143 = sshra.s32 %s138, 7
        %s144 = sand.u32 %s138, 127
        %s145 = sadd.s32 %s142, %s144
        %s146 = sld [smem:[#allocation5 + %s145]]
        %s147 = sshrl.u32 %s146, 3
        %s148 = sand.u32 %s146, 7
        %s149 = smul.u32 %s147, 16
        %s150 = sadd.s32 %s148, %s149
        %s151 = scalar_lea.hbm %s1, %s150
        %s152 = scalar_lea.vmem [#allocation2], 3
        %s153 = scalar_lea.sflag [#allocation3], 3
        %s154 = sshll.u32 %s151, 4
        %s155 = int_to_ptr.hbm [resolvable:$true] %s154
        %s156 = sshll.u32 %s152, 4
        %s157 = int_to_ptr.vmem [resolvable:$true] %s156
        %161 = dma.hbm_to_vmem [thread:$0]  %s155, 32, %s157, %s153, 128, 128, 1
        %s162 = sadd.s32 %s68, 4
        %s163 = sshra.s32 %s162, 7
        %s164 = sand.u32 %s162, 127
        %s165 = sadd.s32 %s163, %s25
        %s166 = smul.u32 %s165, 128
        %s167 = sshra.s32 %s162, 7
        %s168 = sand.u32 %s162, 127
        %s169 = sadd.s32 %s166, %s168
        %s170 = sld [smem:[#allocation5 + %s169]]
        %s171 = sshrl.u32 %s170, 3
        %s172 = sand.u32 %s170, 7
        %s173 = smul.u32 %s171, 16
        %s174 = sadd.s32 %s172, %s173
        %s175 = scalar_lea.hbm %s1, %s174
        %s176 = scalar_lea.vmem [#allocation2], 4
        %s177 = scalar_lea.sflag [#allocation3], 4
        %s178 = sshll.u32 %s175, 4
        %s179 = int_to_ptr.hbm [resolvable:$true] %s178
        %s180 = sshll.u32 %s176, 4
        %s181 = int_to_ptr.vmem [resolvable:$true] %s180
        %185 = dma.hbm_to_vmem [thread:$0]  %s179, 32, %s181, %s177, 128, 128, 1
        %s186 = sadd.s32 %s68, 5
        %s187 = sshra.s32 %s186, 7
        %s188 = sand.u32 %s186, 127
        %s189 = sadd.s32 %s187, %s25
        %s190 = smul.u32 %s189, 128
        %s191 = sshra.s32 %s186, 7
        %s192 = sand.u32 %s186, 127
        %s193 = sadd.s32 %s190, %s192
        %s194 = sld [smem:[#allocation5 + %s193]]
        %s195 = sshrl.u32 %s194, 3
        %s196 = sand.u32 %s194, 7
        %s197 = smul.u32 %s195, 16
        %s198 = sadd.s32 %s196, %s197
        %s199 = scalar_lea.hbm %s1, %s198
        %s200 = scalar_lea.vmem [#allocation2], 5
        %s201 = scalar_lea.sflag [#allocation3], 5
        %s202 = sshll.u32 %s199, 4
        %s203 = int_to_ptr.hbm [resolvable:$true] %s202
        %s204 = sshll.u32 %s200, 4
        %s205 = int_to_ptr.vmem [resolvable:$true] %s204
        %209 = dma.hbm_to_vmem [thread:$0]  %s203, 32, %s205, %s201, 128, 128, 1
        %s210 = sadd.s32 %s68, 6
        %s211 = sshra.s32 %s210, 7
        %s212 = sand.u32 %s210, 127
        %s213 = sadd.s32 %s211, %s25
        %s214 = smul.u32 %s213, 128
        %s215 = sshra.s32 %s210, 7
        %s216 = sand.u32 %s210, 127
        %s217 = sadd.s32 %s214, %s216
        %s218 = sld [smem:[#allocation5 + %s217]]
        %s219 = sshrl.u32 %s218, 3
        %s220 = sand.u32 %s218, 7
        %s221 = smul.u32 %s219, 16
        %s222 = sadd.s32 %s220, %s221
        %s223 = scalar_lea.hbm %s1, %s222
        %s224 = scalar_lea.vmem [#allocation2], 6
        %s225 = scalar_lea.sflag [#allocation3], 6
        %s226 = sshll.u32 %s223, 4
        %s227 = int_to_ptr.hbm [resolvable:$true] %s226
        %s228 = sshll.u32 %s224, 4
        %s229 = int_to_ptr.vmem [resolvable:$true] %s228
        %233 = dma.hbm_to_vmem [thread:$0]  %s227, 32, %s229, %s225, 128, 128, 1
        %s234 = sadd.s32 %s68, 7
        %s235 = sshra.s32 %s234, 7
        %s236 = sand.u32 %s234, 127
        %s237 = sadd.s32 %s235, %s25
        %s238 = smul.u32 %s237, 128
        %s239 = sshra.s32 %s234, 7
        %s240 = sand.u32 %s234, 127
        %s241 = sadd.s32 %s238, %s240
        %s242 = sld [smem:[#allocation5 + %s241]]
        %s243 = sshrl.u32 %s242, 3
        %s244 = sand.u32 %s242, 7
        %s245 = smul.u32 %s243, 16
        %s246 = sadd.s32 %s244, %s245
        %s247 = scalar_lea.hbm %s1, %s246
        %s248 = scalar_lea.vmem [#allocation2], 7
        %s249 = scalar_lea.sflag [#allocation3], 7
        %s250 = sshll.u32 %s247, 4
        %s251 = int_to_ptr.hbm [resolvable:$true] %s250
        %s252 = sshll.u32 %s248, 4
        %s253 = int_to_ptr.vmem [resolvable:$true] %s252
        %257 = dma.hbm_to_vmem [thread:$0]  %s251, 32, %s253, %s249, 128, 128, 1
        %259 = dma.done [#allocation3], 32
        %261 = dma.done %s105, 32
        %263 = dma.done %s129, 32
        %265 = dma.done %s153, 32
        %267 = dma.done %s177, 32
        %269 = dma.done %s201, 32
        %271 = dma.done %s225, 32
        %273 = dma.done %s249, 32
        %v274 = vld [vmem:[#allocation2] sm:$0xff]
        %v275 = vld [vmem:[#allocation2 + $0x8] sm:$0xff]
        %276 = vst [vmem:[%s67] sm:$0xff] %v274
        %277 = vst [vmem:[%s67 + $0x8] sm:$0xff] %v275
        %s278 = sand.u32 %s40, 1
        %s279 = scalar_lea.sflag [#allocation7], %s278
        %s280 = sand.u32 %s40, 1
        %s281 = smul.addr %s280, 16
        %s282 = scalar_lea.vmem [#allocation6], %s281
        // Predicated region
        $region13: #{tpu_custom_call.1} parent=11 // pred_check
          %p283 = pneg %p46
        $region14: #{tpu_custom_call.1} parent=11 // pred_check_branch
          %285 = sbr.rel (%p283) target = $region16
        $region15: #{tpu_custom_call.1} parent=11 // pred_region
          %287 = vsyncadd %s279, 0
          %s288 = smul.addr %s26, 2
          %s289 = smul.addr %s25, 4
          %s290 = sadd.s32 %s288, %s289
          %s291 = smul.addr %s290, 8
          %s292 = scalar_lea.hbm %s2, %s291
          %s294 = sshll.u32 %s282, 4
          %s295 = int_to_ptr.vmem [resolvable:$true] %s294
          %s296 = sshll.u32 %s292, 4
          %s297 = int_to_ptr.hbm [resolvable:$true] %s296
          %299 = dma.vmem_to_hbm [thread:$0]  %s295, 256, %s297, %s279
        $region16: #{tpu_custom_call.1} parent=11 // pred_fallthru
          _
      $region12: #{tpu_custom_call.1} parent=5 // pred_fallthru
        _
      %p300 = scmp.le.s32.totalorder 1, %s19
      // Predicated region
      $region17: #{tpu_custom_call.1} parent=5 // pred_check
        %p301 = pneg %p300
      $region18: #{tpu_custom_call.1} parent=5 // pred_check_branch
        %303 = sbr.rel (%p301) target = $region20
      $region19: #{tpu_custom_call.1} parent=5 // pred_region
        %s304 = ssub.s32 %s19, 1
        // Predicated region
        $region21: #{tpu_custom_call.1} parent=19 // pred_check
          %p305 = pneg %p52
        $region22: #{tpu_custom_call.1} parent=19 // pred_check_branch
          %307 = sbr.rel (%p305) target = $region24
        $region23: #{tpu_custom_call.1} parent=19 // pred_region
          %s308 = sand.u32 %s43, 1
          %s309 = scalar_lea.sflag [#allocation7], %s308
          %s310 = sand.u32 %s43, 1
          %s311 = smul.addr %s310, 16
          %s312 = scalar_lea.vmem [#allocation6], %s311
          %314 = dma.done %s309, 256
        $region24: #{tpu_custom_call.1} parent=19 // pred_fallthru
          _
      $region20: #{tpu_custom_call.1} parent=5 // pred_fallthru
        _
    $region6: #{tpu_custom_call.1} parent=1 // loop_footer
      %s23 = sadd.s32 1, %s19
    $region7: #{tpu_custom_call.1} parent=1 // loop_footer_branch
      %18 = sbr.rel target = $region3
    $region8: #{tpu_custom_call.1} parent=1 // loop_exit
      _
    %315 = vsyncpa [#allocation7], 1
    %s316 = scalar_lea.sflag [#allocation7], 1
    %317 = vsyncpa %s316, 1
  %318 = vsyncmov [#allocation3]
  %s319 = vpop.sfrf %318
  %p320 = scmp.eq.s32.totalorder %s319, 0
  %p321 = pneg %p320
  %323 = shalt.err (%p321)
  %s324 = scalar_lea.sflag [#allocation3], 1
  %325 = vsyncmov %s324
  %s326 = vpop.sfrf %325
  %p327 = scmp.eq.s32.totalorder %s326, 0
  %p328 = pneg %p327
  %330 = shalt.err (%p328)
  %s331 = scalar_lea.sflag [#allocation3], 2
  %332 = vsyncmov %s331
  %s333 = vpop.sfrf %332
  %p334 = scmp.eq.s32.totalorder %s333, 0
  %p335 = pneg %p334
  %337 = shalt.err (%p335)
  %s338 = scalar_lea.sflag [#allocation3], 3
  %339 = vsyncmov %s338
  %s340 = vpop.sfrf %339
  %p341 = scmp.eq.s32.totalorder %s340, 0
  %p342 = pneg %p341
  %344 = shalt.err (%p342)
  %s345 = scalar_lea.sflag [#allocation3], 4
  %346 = vsyncmov %s345
  %s347 = vpop.sfrf %346
  %p348 = scmp.eq.s32.totalorder %s347, 0
  %p349 = pneg %p348
  %351 = shalt.err (%p349)
  %s352 = scalar_lea.sflag [#allocation3], 5
  %353 = vsyncmov %s352
  %s354 = vpop.sfrf %353
  %p355 = scmp.eq.s32.totalorder %s354, 0
  %p356 = pneg %p355
  %358 = shalt.err (%p356)
  %s359 = scalar_lea.sflag [#allocation3], 6
  %360 = vsyncmov %s359
  %s361 = vpop.sfrf %360
  %p362 = scmp.eq.s32.totalorder %s361, 0
  %p363 = pneg %p362
  %365 = shalt.err (%p363)
  %s366 = scalar_lea.sflag [#allocation3], 7
  %367 = vsyncmov %s366
  %s368 = vpop.sfrf %367
  %p369 = scmp.eq.s32.totalorder %s368, 0
  %p370 = pneg %p369
  %372 = shalt.err (%p370)

</llo_original>
